<compile_context>
chip_gen: v7x
topology: tpu7x:2x2x1
jax: 0.10.0
libtpu: 0.0.40
codegen_flags: <defaults>
</compile_context>

<pallas_src>
import functools

import jax
import jax.numpy as jnp
from jax.experimental import pallas as pl
from jax.experimental.pallas import tpu as pltpu

_LANE = 128  # TPU lane width; feature dims are padded to a multiple of this.


def _round_up(n, m):
    return ((n + m - 1) // m) * m


def _sigmoid_model_kernel(num_layers, x_ref, *refs):
    """refs = (w0, b0, w1, b1, ..., out_ref).

    x_ref:  (TB, Dpad_in)      f32, lane-dense (padded)
    w_i:    (Dpad_in, Dpad_out) f32, pre-transposed + zero-padded
    b_i:    (1, Dpad_out)       f32, zero-padded
    """
    out_ref = refs[-1]
    y = x_ref[...]
    for i in range(num_layers):
        w = refs[2 * i][...]
        b = refs[2 * i + 1][...]
        if i > 0:
            y = jax.nn.sigmoid(y)
        y = jnp.dot(y, w, preferred_element_type=jnp.float32) + b
    out_ref[...] = y.astype(out_ref.dtype)


def sigmoid_model_forward(x, weights, biases, *, block_b=512):
    """Run the full Linear/Sigmoid chain inside one Pallas kernel.

    x:       (B, input_dim) float32
    weights: list of (d_out, d_in) float32  (PyTorch nn.Linear layout)
    biases:  list of (d_out,) float32
    block_b: batch tile size (rows per grid step), multiple of 8.
    """
    num_layers = len(weights)
    B, in_dim = x.shape
    out_dim = weights[-1].shape[0]

    # ---- host-side (XLA) layout prep: transpose + zero-pad to lane width ----
    d_in = in_dim
    d_in_p = _round_up(d_in, _LANE)
    padded_w, padded_b = [], []
    for w, b in zip(weights, biases):
        d_out = w.shape[0]
        d_out_p = _round_up(d_out, _LANE)
        wt = jnp.zeros((d_in_p, d_out_p), jnp.float32).at[:d_in, :d_out].set(w.T)
        bp = jnp.zeros((1, d_out_p), jnp.float32).at[0, :d_out].set(b)
        padded_w.append(wt)
        padded_b.append(bp)
        d_in, d_in_p = d_out, d_out_p
    out_dim_p = padded_w[-1].shape[1]
    in_dim_p = padded_w[0].shape[0]

    # Batch tiling: multiple of 8 (sublane), padded batch to a whole grid.
    tb = min(block_b, _round_up(B, 8))
    tb = _round_up(tb, 8)
    b_pad = _round_up(B, tb)
    x_p = jnp.zeros((b_pad, in_dim_p), jnp.float32).at[:B, :in_dim].set(x)

    grid = (b_pad // tb,)

    in_specs = [pl.BlockSpec((tb, in_dim_p), lambda i: (i, 0))]
    args = [x_p]
    for wp, bp in zip(padded_w, padded_b):
        # Constant index_map -> weight/bias tiles stay resident in VMEM.
        in_specs.append(pl.BlockSpec(wp.shape, lambda i: (0, 0)))
        in_specs.append(pl.BlockSpec(bp.shape, lambda i: (0, 0)))
        args.append(wp)
        args.append(bp)

    kernel = functools.partial(_sigmoid_model_kernel, num_layers)

    out_padded = pl.pallas_call(
        kernel,
        out_shape=jax.ShapeDtypeStruct((b_pad, out_dim_p), jnp.float32),
        grid=grid,
        in_specs=in_specs,
        out_specs=pl.BlockSpec((tb, out_dim_p), lambda i: (i, 0)),
        compiler_params=pltpu.CompilerParams(
            dimension_semantics=("parallel",),  # v7x megacore; no-op on 1-TC chips
        ),
    )(*args)

    return out_padded[:B, :out_dim]


def init_params(key, input_dim, linear_dim):
    """Deterministic PyTorch-style init: U(-1/sqrt(fan_in), 1/sqrt(fan_in))."""
    weights, biases = [], []
    d_in = input_dim
    for d_out in linear_dim:
        key, kw, kb = jax.random.split(key, 3)
        bound = 1.0 / (d_in ** 0.5)
        weights.append(
            jax.random.uniform(kw, (d_out, d_in), jnp.float32, -bound, bound))
        biases.append(
            jax.random.uniform(kb, (d_out,), jnp.float32, -bound, bound))
        d_in = d_out
    return weights, biases


def reference_forward(x, weights, biases):
    y = x
    for i, (w, b) in enumerate(zip(weights, biases)):
        if i > 0:
            y = jax.nn.sigmoid(y)
        y = y @ w.T + b
    return y


if __name__ == "__main__":
    key = jax.random.PRNGKey(0)

    # Module as instantiated in the script: data_x has 3 cols, data_y has 3
    # cols -> input_dim = 3, linear_dim = [3].
    input_dim = 3
    linear_dim = [3]
    batch = 512  # small, but enough to exercise a multi-step batch grid

    key, kx, kp = jax.random.split(key, 3)
    x = jax.random.normal(kx, (batch, input_dim), jnp.float32)
    weights, biases = init_params(kp, input_dim, linear_dim)

    # block_b=128 here so the demo runs a 4-step pipelined grid; default is 512
    # (v6e-roofline-friendly) for real batches.
    out = sigmoid_model_forward(x, weights, biases, block_b=128)
    out = jax.block_until_ready(out)

    ref = reference_forward(x, weights, biases)
    assert out.shape == (batch, linear_dim[-1])
    assert jnp.allclose(out, ref, atol=1e-5, rtol=1e-5), "mismatch vs reference"

    # Also check a deeper chain (sigmoid actually applied between layers) and
    # a batch that is not a multiple of the tile.
    deep_dims = [5, 4, 3]
    key, kx2, kp2 = jax.random.split(key, 3)
    x2 = jax.random.normal(kx2, (77, input_dim), jnp.float32)
    w2, b2 = init_params(kp2, input_dim, deep_dims)
    out2 = jax.block_until_ready(sigmoid_model_forward(x2, w2, b2, block_b=128))
    ref2 = reference_forward(x2, w2, b2)
    assert out2.shape == (77, deep_dims[-1])
    assert jnp.allclose(out2, ref2, atol=1e-5, rtol=1e-5), "deep chain mismatch"

    print("KERNEL_OK")
</pallas_src>

<mosaic_0001>
module attributes {stable_mosaic.version = 11 : i64} {
  func.func @_sigmoid_model_kernel(%arg0: i32, %arg1: memref<128x128xf32, #tpu.memory_space<vmem>>, %arg2: memref<128x128xf32, #tpu.memory_space<vmem>>, %arg3: memref<1x128xf32, #tpu.memory_space<vmem>>, %arg4: memref<128x128xf32, #tpu.memory_space<vmem>>) attributes {dimension_semantics = [#tpu.dimension_semantics<parallel>], iteration_bounds = array<i64: 4>, scalar_prefetch = 0 : i64, scratch_operands = 0 : i64, tpu.core_type = #tpu.core_type<tc>, window_params = [{transform_indices = @transform_0, window_bounds = array<i64: 128, 128>}, {pipeline_mode = #tpu.pipeline_mode<synchronous>, transform_indices = @transform_1, window_bounds = array<i64: 128, 128>}, {pipeline_mode = #tpu.pipeline_mode<synchronous>, transform_indices = @transform_2, window_bounds = array<i64: 1, 128>}, {transform_indices = @transform_3, window_bounds = array<i64: 128, 128>}]} {
    %c0 = arith.constant 0 : index
    %c0_0 = arith.constant 0 : index
    %0 = vector.load %arg1[%c0, %c0_0] : memref<128x128xf32, #tpu.memory_space<vmem>>, vector<128x128xf32>
    %c0_1 = arith.constant 0 : index
    %c0_2 = arith.constant 0 : index
    %1 = vector.load %arg2[%c0_1, %c0_2] : memref<128x128xf32, #tpu.memory_space<vmem>>, vector<128x128xf32>
    %c0_3 = arith.constant 0 : index
    %c0_4 = arith.constant 0 : index
    %2 = vector.load %arg3[%c0_3, %c0_4] : memref<1x128xf32, #tpu.memory_space<vmem>>, vector<1x128xf32>
    %cst = arith.constant dense<0.000000e+00> : vector<128x128xf32>
    %3 = tpu.matmul %0, %1, %cst {dimension_numbers = #tpu.dot_dimension_numbers<[1], [0], [0], [1], [0, 0, 1, 1], [], []>} : vector<128x128xf32>, vector<128x128xf32>, vector<128x128xf32> -> vector<128x128xf32>
    %4 = vector.broadcast %2 : vector<1x128xf32> to vector<128x128xf32>
    %5 = arith.addf %3, %4 : vector<128x128xf32>
    %c0_5 = arith.constant 0 : index
    %c0_6 = arith.constant 0 : index
    %6 = vector.load %arg4[%c0_5, %c0_6] : memref<128x128xf32, #tpu.memory_space<vmem>>, vector<128x128xf32>
    tpu.vector_store %arg4[%c0_5, %c0_6], %5 {strides = array<i32>} : memref<128x128xf32, #tpu.memory_space<vmem>>, vector<128x128xf32>,
    return
  }
  func.func @transform_0(%arg0: i32) -> (i32, i32) {
    %c0_i32 = arith.constant 0 : i32
    %c0_i32_0 = arith.constant 0 : i32
    return %arg0, %c0_i32 : i32, i32
  }
  func.func @transform_1(%arg0: i32) -> (i32, i32) {
    %c0_i32 = arith.constant 0 : i32
    %c0_i32_0 = arith.constant 0 : i32
    %c0_i32_1 = arith.constant 0 : i32
    return %c0_i32, %c0_i32_0 : i32, i32
  }
  func.func @transform_2(%arg0: i32) -> (i32, i32) {
    %c0_i32 = arith.constant 0 : i32
    %c0_i32_0 = arith.constant 0 : i32
    %c0_i32_1 = arith.constant 0 : i32
    return %c0_i32, %c0_i32_0 : i32, i32
  }
  func.func @transform_3(%arg0: i32) -> (i32, i32) {
    %c0_i32 = arith.constant 0 : i32
    %c0_i32_0 = arith.constant 0 : i32
    return %arg0, %c0_i32 : i32, i32
  }
}

</mosaic_0001>

<llo_original>
// kernel: tpu_custom_call.1
$region0: #{tpu_custom_call.1}
  #allocation0 [shape = 'u32[]', space=smem, size = 0x4, offset = 0x4, fixed_abs, tag = 'smem constant byte address 0x4 - core index']
  #allocation1 [shape = 'u32[144,128]{1,0:T(1,128)}', space=vmem, size = 0x12000, scoped, tag = 'internal scratch']
  %s0 = inlined_call_operand.hbm [shape: f32[512,128], index: 0, kind: input, shape index: {}]
  %s1 = inlined_call_operand.hbm [shape: f32[128,128], index: 1, kind: input, shape index: {}]
  %s2 = inlined_call_operand.vmem [shape: f32[1,128], index: 2, kind: input, shape index: {}]
  %s3 = inlined_call_operand.hbm [shape: f32[512,128], index: 3, kind: output, shape index: {}]
  %s4 = sld [smem:[#allocation0]]
  $region53: #{tpu_custom_call.1} parent=0
    _
  %s6 = ssub.s32 1, %s4
  %s7 = scalar_select 0, %s6, %s4
  $region1: #{tpu_custom_call.1} parent=0
    #allocation2 [shape = 'u8[131072]{0}', space=vmem, size = 0x20000, scoped, tag = 'input window, operand 0']
    #allocation3 [shape = 's32[2]{0}', space=sflag, size = 0x8, scoped, tag = 'scoped memory for tpu_custom_call.1']
    #allocation4 [shape = 's32[2]{0}', space=sflag, size = 0x8, scoped, tag = 'scoped memory for tpu_custom_call.1']
    #allocation5 [shape = 'u8[65536]{0}', space=vmem, size = 0x10000, scoped, tag = 'input window, operand 1, single buffered']
    #allocation6 [shape = 's32[1]{0}', space=sflag, size = 0x4, scoped, tag = 'scoped memory for tpu_custom_call.1']
    #allocation7 [shape = 'u8[131072]{0}', space=vmem, size = 0x20000, scoped, tag = 'output window, operand 0']
    %8 = vsyncpa [#allocation3], 0
    %s9 = scalar_lea.sflag [#allocation3], 1
    %10 = vsyncpa %s9, 0
    %11 = vsyncpa [#allocation6], 0
    %12 = vsyncpa [#allocation4], 0
    %s13 = scalar_lea.sflag [#allocation4], 1
    %14 = vsyncpa %s13, 0
    loop: start=0, step=1, limit=6
    $region2: #{tpu_custom_call.1} parent=1 // loop_pre_header
      _
    $region3: #{tpu_custom_call.1} parent=1 // loop_header
      %s16 = sphi 0, %s20
      %p17 = scmp.ge.s32.totalorder %s16, 6
      %s26 = sphi 0, %s28
      %s29 = sphi 0, %s26
      %s30 = sphi 0, %s29
      %s46 = sphi 0, %s30
      %s50 = sphi 0, %s50
      %s52 = sphi 0, %s50
      %s53 = sphi 0, %s52
      %s67 = sphi 0, %s53
      %s71 = sphi 0, %s71
      %s73 = sphi 0, %s71
      %s74 = sphi 0, %s73
      %s88 = sphi 0, %s74
      %s94 = sphi 0, %s96
      %s97 = sphi 0, %s94
      %s98 = sphi 0, %s97
      %s114 = sphi 0, %s98
    $region4: #{tpu_custom_call.1} parent=1 // loop_header_branch
      %19 = sbr.rel (%p17) target = $region8
    $region5: #{tpu_custom_call.1} parent=1 // loop_body
      %s21 = ssub.s32 %s16, 1
      %s22 = ssub.s32 %s16, 2
      %s23 = sadd.s32 %s16, 1
      %s24 = ssub.s32 %s16, %s23
      %p25 = scmp.eq.s32.totalorder %s24, 0
      %s27 = sadd.s32 %s26, 1
      %s28 = scalar_select %p25, %s26, %s27
      %p31 = pneg %p25
      %p32 = scmp.eq.s32.totalorder %s16, 3
      %p33 = por %p31, %p32
      %p34 = scmp.ne.s32.totalorder %s26, %s29
      %p35 = scmp.eq.s32.totalorder %s16, 0
      %p36 = por %p34, %p35
      %p37 = scmp.ne.s32.totalorder %s26, %s29
      %p38 = scmp.eq.s32.totalorder %s21, 3
      %p39 = por %p37, %p38
      %p40 = scmp.ne.s32.totalorder %s29, %s30
      %p41 = scmp.eq.s32.totalorder %s21, 0
      %p42 = por %p40, %p41
      %p43 = scmp.ne.s32.totalorder %s29, %s30
      %p44 = scmp.eq.s32.totalorder %s22, 3
      %p45 = por %p43, %p44
      %p47 = scmp.ne.s32.totalorder %s30, %s46
      %p48 = scmp.eq.s32.totalorder %s22, 0
      %p49 = por %p47, %p48
      %s51 = sadd.s32 %s50, 1
      %p54 = scmp.eq.s32.totalorder %s16, 3
      %p55 = scmp.ne.s32.totalorder %s50, %s52
      %p56 = scmp.eq.s32.totalorder %s16, 0
      %p57 = por %p55, %p56
      %p58 = scmp.ne.s32.totalorder %s50, %s52
      %p59 = scmp.eq.s32.totalorder %s21, 3
      %p60 = por %p58, %p59
      %p61 = scmp.ne.s32.totalorder %s52, %s53
      %p62 = scmp.eq.s32.totalorder %s21, 0
      %p63 = por %p61, %p62
      %p64 = scmp.ne.s32.totalorder %s52, %s53
      %p65 = scmp.eq.s32.totalorder %s22, 3
      %p66 = por %p64, %p65
      %p68 = scmp.ne.s32.totalorder %s53, %s67
      %p69 = scmp.eq.s32.totalorder %s22, 0
      %p70 = por %p68, %p69
      %s72 = sadd.s32 %s71, 1
      %p75 = scmp.eq.s32.totalorder %s16, 3
      %p76 = scmp.ne.s32.totalorder %s71, %s73
      %p77 = scmp.eq.s32.totalorder %s16, 0
      %p78 = por %p76, %p77
      %p79 = scmp.ne.s32.totalorder %s71, %s73
      %p80 = scmp.eq.s32.totalorder %s21, 3
      %p81 = por %p79, %p80
      %p82 = scmp.ne.s32.totalorder %s73, %s74
      %p83 = scmp.eq.s32.totalorder %s21, 0
      %p84 = por %p82, %p83
      %p85 = scmp.ne.s32.totalorder %s73, %s74
      %p86 = scmp.eq.s32.totalorder %s22, 3
      %p87 = por %p85, %p86
      %p89 = scmp.ne.s32.totalorder %s74, %s88
      %p90 = scmp.eq.s32.totalorder %s22, 0
      %p91 = por %p89, %p90
      %s92 = ssub.s32 %s16, %s23
      %p93 = scmp.eq.s32.totalorder %s92, 0
      %s95 = sadd.s32 %s94, 1
      %s96 = scalar_select %p93, %s94, %s95
      %p99 = pneg %p93
      %p100 = scmp.eq.s32.totalorder %s16, 3
      %p101 = por %p99, %p100
      %p102 = scmp.ne.s32.totalorder %s94, %s97
      %p103 = scmp.eq.s32.totalorder %s16, 0
      %p104 = por %p102, %p103
      %p105 = scmp.ne.s32.totalorder %s94, %s97
      %p106 = scmp.eq.s32.totalorder %s21, 3
      %p107 = por %p105, %p106
      %p108 = scmp.ne.s32.totalorder %s97, %s98
      %p109 = scmp.eq.s32.totalorder %s21, 0
      %p110 = por %p108, %p109
      %p111 = scmp.ne.s32.totalorder %s97, %s98
      %p112 = scmp.eq.s32.totalorder %s22, 3
      %p113 = por %p111, %p112
      %p115 = scmp.ne.s32.totalorder %s98, %s114
      %p116 = scmp.eq.s32.totalorder %s22, 0
      %p117 = por %p115, %p116
      %p118 = scmp.le.s32.totalorder 1, %s16
      %p119 = scmp.lt.s32.totalorder %s16, 5
      %p120 = pnand %p118, %p119
      %p121 = pneg %p120
      // Predicated region
      $region9: #{tpu_custom_call.1} parent=5 // pred_check
        _
      $region10: #{tpu_custom_call.1} parent=5 // pred_check_branch
        %123 = sbr.rel (%p120) target = $region12
      $region11: #{tpu_custom_call.1} parent=5 // pred_region
        %s124 = ssub.s32 %s16, 1
        // Predicated region
        $region13: #{tpu_custom_call.1} parent=11 // pred_check
          %p125 = pneg %p63
        $region14: #{tpu_custom_call.1} parent=11 // pred_check_branch
          %127 = sbr.rel (%p125) target = $region16
        $region15: #{tpu_custom_call.1} parent=11 // pred_region
          %s129 = ssub.s32 2048, 2048
          %130 = vsyncadd [#allocation6], %s129
          %s131 = sshll.u32 [#allocation5], 4
          %s132 = int_to_ptr.vmem [resolvable:$true] %s131
          %137 = dma.hbm_to_vmem [thread:$0]  %s1, 2048, %s132, [#allocation6], 128, 128, 8
        $region16: #{tpu_custom_call.1} parent=11 // pred_fallthru
          _
        // Predicated region
        $region17: #{tpu_custom_call.1} parent=11 // pred_check
          %p138 = pneg %p84
        $region18: #{tpu_custom_call.1} parent=11 // pred_check_branch
          %140 = sbr.rel (%p138) target = $region20
        $region19: #{tpu_custom_call.1} parent=11 // pred_region
          _
        $region20: #{tpu_custom_call.1} parent=11 // pred_fallthru
          _
      $region12: #{tpu_custom_call.1} parent=5 // pred_fallthru
        _
      %p141 = scmp.lt.s32.totalorder %s16, 4
      // Predicated region
      $region21: #{tpu_custom_call.1} parent=5 // pred_check
        %p142 = pneg %p141
      $region22: #{tpu_custom_call.1} parent=5 // pred_check_branch
        %144 = sbr.rel (%p142) target = $region24
      $region23: #{tpu_custom_call.1} parent=5 // pred_region
        // Predicated region
        $region25: #{tpu_custom_call.1} parent=23 // pred_check
          %p145 = pneg %p36
        $region26: #{tpu_custom_call.1} parent=23 // pred_check_branch
          %147 = sbr.rel (%p145) target = $region28
        $region27: #{tpu_custom_call.1} parent=23 // pred_region
          %s148 = sand.u32 %s26, 1
          %s149 = scalar_lea.sflag [#allocation3], %s148
          %s150 = sand.u32 %s26, 1
          %s151 = smul.addr %s150, 128
          %s152 = scalar_lea.vmem [#allocation2], %s151
          %s153 = smul.u32 16, %s16
          %s155 = ssub.s32 2048, 2048
          %156 = vsyncadd %s149, %s155
          %s157 = smul.addr %s153, 128
          %s158 = scalar_lea.hbm %s0, %s157
          %s159 = sshll.u32 %s152, 4
          %s160 = int_to_ptr.vmem [resolvable:$true] %s159
          %165 = dma.hbm_to_vmem [thread:$0]  %s158, 2048, %s160, %s149, 128, 128, 8
        $region28: #{tpu_custom_call.1} parent=23 // pred_fallthru
          _
      $region24: #{tpu_custom_call.1} parent=5 // pred_fallthru
        _
      %p166 = scmp.le.s32.totalorder 1, %s16
      %p167 = scmp.lt.s32.totalorder %s16, 5
      %p168 = pnand %p166, %p167
      %p169 = pneg %p168
      // Predicated region
      $region29: #{tpu_custom_call.1} parent=5 // pred_check
        _
      $region30: #{tpu_custom_call.1} parent=5 // pred_check_branch
        %171 = sbr.rel (%p168) target = $region32
      $region31: #{tpu_custom_call.1} parent=5 // pred_region
        %s172 = ssub.s32 %s16, 1
        %s173 = sand.u32 %s29, 1
        %s174 = scalar_lea.sflag [#allocation3], %s173
        %s175 = sand.u32 %s29, 1
        %s176 = smul.addr %s175, 128
        %s177 = scalar_lea.vmem [#allocation2], %s176
        // Predicated region
        $region33: #{tpu_custom_call.1} parent=31 // pred_check
          %p178 = pneg %p42
        $region34: #{tpu_custom_call.1} parent=31 // pred_check_branch
          %180 = sbr.rel (%p178) target = $region36
        $region35: #{tpu_custom_call.1} parent=31 // pred_region
          %181 = dma.done %s174, 2048
        $region36: #{tpu_custom_call.1} parent=31 // pred_fallthru
          _
        // Predicated region
        $region37: #{tpu_custom_call.1} parent=31 // pred_check
          %p182 = pneg %p63
        $region38: #{tpu_custom_call.1} parent=31 // pred_check_branch
          %184 = sbr.rel (%p182) target = $region40
        $region39: #{tpu_custom_call.1} parent=31 // pred_region
          %185 = dma.done [#allocation6], 2048
        $region40: #{tpu_custom_call.1} parent=31 // pred_fallthru
          _
        %s186 = sand.u32 %s29, 1
        %s187 = scalar_lea.sflag [#allocation3], %s186
        %s188 = sand.u32 %s29, 1
        %s189 = smul.addr %s188, 128
        %s190 = scalar_lea.vmem [#allocation2], %s189
        %p191 = pneg %p42
        %p192 = pneg %p39
        %p193 = pneg %p63
        %p194 = pneg %p60
        %p195 = pneg %p84
        %p196 = pneg %p81
        %p197 = pneg %p110
        %p198 = pneg %p107
        %s199 = sand.u32 %s97, 1
        %s200 = scalar_lea.sflag [#allocation4], %s199
        %s201 = sand.u32 %s97, 1
        %s202 = smul.addr %s201, 128
        %s203 = scalar_lea.vmem [#allocation7], %s202
        %s204 = smul.u32 16, %s21
        %s205 = smul.u32 16, %s21
        %v206 = vld [vmem:[%s177] sm:$0xff]
        %v207 = vld [vmem:[%s177 + $0x8] sm:$0xff]
        %v208 = vld [vmem:[%s177 + $0x10] sm:$0xff]
        %v209 = vld [vmem:[%s177 + $0x18] sm:$0xff]
        %v210 = vld [vmem:[%s177 + $0x20] sm:$0xff]
        %v211 = vld [vmem:[%s177 + $0x28] sm:$0xff]
        %v212 = vld [vmem:[%s177 + $0x30] sm:$0xff]
        %v213 = vld [vmem:[%s177 + $0x38] sm:$0xff]
        %v214 = vld [vmem:[%s177 + $0x40] sm:$0xff]
        %v215 = vld [vmem:[%s177 + $0x48] sm:$0xff]
        %v216 = vld [vmem:[%s177 + $0x50] sm:$0xff]
        %v217 = vld [vmem:[%s177 + $0x58] sm:$0xff]
        %v218 = vld [vmem:[%s177 + $0x60] sm:$0xff]
        %v219 = vld [vmem:[%s177 + $0x68] sm:$0xff]
        %v220 = vld [vmem:[%s177 + $0x70] sm:$0xff]
        %v221 = vld [vmem:[%s177 + $0x78] sm:$0xff]
        %v222 = vld [vmem:[#allocation5] sm:$0xff]
        %v223 = vld [vmem:[#allocation5 + $0x8] sm:$0xff]
        %v224 = vld [vmem:[#allocation5 + $0x10] sm:$0xff]
        %v225 = vld [vmem:[#allocation5 + $0x18] sm:$0xff]
        %v226 = vld [vmem:[#allocation5 + $0x20] sm:$0xff]
        %v227 = vld [vmem:[#allocation5 + $0x28] sm:$0xff]
        %v228 = vld [vmem:[#allocation5 + $0x30] sm:$0xff]
        %v229 = vld [vmem:[#allocation5 + $0x38] sm:$0xff]
        %v230 = vld [vmem:[#allocation5 + $0x40] sm:$0xff]
        %v231 = vld [vmem:[#allocation5 + $0x48] sm:$0xff]
        %v232 = vld [vmem:[#allocation5 + $0x50] sm:$0xff]
        %v233 = vld [vmem:[#allocation5 + $0x58] sm:$0xff]
        %v234 = vld [vmem:[#allocation5 + $0x60] sm:$0xff]
        %v235 = vld [vmem:[#allocation5 + $0x68] sm:$0xff]
        %v236 = vld [vmem:[#allocation5 + $0x70] sm:$0xff]
        %v237 = vld [vmem:[#allocation5 + $0x78] sm:$0xff]
        %v238 = vld [vmem:[%s2] sm:$0x1]
        %v240 = vlaneseq
        %v241 = vshrl.u32 %v240, 7
        %v242 = vsub.s32 0, %v241
        %v243 = vrot.slane %v238, %v242
        %245 = vmatprep.subr.mxu0 0.0
        %246 = vmatpush1.msra.mxu0 %v222
        %247 = vmatprep.subr.mxu0 0.0
        %248 = vmatpush1.msra.mxu0 %v223
        %249 = vmatprep.subr.mxu0 0.0
        %250 = vmatpush1.msra.mxu0 %v224
        %251 = vmatprep.subr.mxu0 0.0
        %252 = vmatpush1.msra.mxu0 %v225
        %253 = vmatprep.subr.mxu0 0.0
        %254 = vmatpush1.msra.mxu0 %v226
        %255 = vmatprep.subr.mxu0 0.0
        %256 = vmatpush1.msra.mxu0 %v227
        %257 = vmatprep.subr.mxu0 0.0
        %258 = vmatpush1.msra.mxu0 %v228
        %259 = vmatprep.subr.mxu0 0.0
        %260 = vmatpush1.msra.mxu0 %v229
        %261 = vmatprep.subr.mxu0 0.0
        %262 = vmatpush1.msra.mxu0 %v230
        %263 = vmatprep.subr.mxu0 0.0
        %264 = vmatpush1.msra.mxu0 %v231
        %265 = vmatprep.subr.mxu0 0.0
        %266 = vmatpush1.msra.mxu0 %v232
        %267 = vmatprep.subr.mxu0 0.0
        %268 = vmatpush1.msra.mxu0 %v233
        %269 = vmatprep.subr.mxu0 0.0
        %270 = vmatpush1.msra.mxu0 %v234
        %271 = vmatprep.subr.mxu0 0.0
        %272 = vmatpush1.msra.mxu0 %v235
        %273 = vmatprep.subr.mxu0 0.0
        %274 = vmatpush1.msra.mxu0 %v236
        %275 = vmatprep.subr.mxu0 0.0
        %276 = vmatpush1.msra.mxu0 %v237
        %277 = vmatprep.subr.mxu0 0.0
        %278 = vmatpush1.msra.mxu0 0.0
        %279 = vmatprep.subr.mxu0 0.0
        %280 = vmatpush1.msra.mxu0 0.0
        %281 = vmatprep.subr.mxu0 0.0
        %282 = vmatpush1.msra.mxu0 0.0
        %283 = vmatprep.subr.mxu0 0.0
        %284 = vmatpush1.msra.mxu0 0.0
        %285 = vmatprep.subr.mxu0 0.0
        %286 = vmatpush1.msra.mxu0 0.0
        %287 = vmatprep.subr.mxu0 0.0
        %288 = vmatpush1.msra.mxu0 0.0
        %289 = vmatprep.subr.mxu0 0.0
        %290 = vmatpush1.msra.mxu0 0.0
        %291 = vmatprep.subr.mxu0 0.0
        %292 = vmatpush1.msra.mxu0 0.0
        %293 = vmatprep.subr.mxu0 0.0
        %294 = vmatpush1.msra.mxu0 0.0
        %295 = vmatprep.subr.mxu0 0.0
        %296 = vmatpush1.msra.mxu0 0.0
        %297 = vmatprep.subr.mxu0 0.0
        %298 = vmatpush1.msra.mxu0 0.0
        %299 = vmatprep.subr.mxu0 0.0
        %300 = vmatpush1.msra.mxu0 0.0
        %301 = vmatprep.subr.mxu0 0.0
        %302 = vmatpush1.msra.mxu0 0.0
        %303 = vmatprep.subr.mxu0 0.0
        %304 = vmatpush1.msra.mxu0 0.0
        %305 = vmatprep.subr.mxu0 0.0
        %306 = vmatpush1.msra.mxu0 0.0
        %307 = vmatprep.subr.mxu0 0.0
        %308 = vmatpush1.msra.mxu0 0.0
        %309 = vmatprep.mubr.f32.mxu0 0.0
        %310 = vmatmul.mubr.f32.gmra.mrb[0].mxu0 %v206
        %v311 = vpop.f32.mrb[0].mxu0
        %v312 = vadd.f32 %v243, %v311
        %v313 = vpop.f32.mrb[0].mxu0
        %314 = vmatprep.mubr.f32.mxu0 0.0
        %315 = vmatmul.mubr.f32.gmra.mrb[0].mxu0 %v207
        %v316 = vpop.f32.mrb[0].mxu0
        %v317 = vadd.f32 %v243, %v316
        %v318 = vpop.f32.mrb[0].mxu0
        %319 = vmatprep.mubr.f32.mxu0 0.0
        %320 = vmatmul.mubr.f32.gmra.mrb[0].mxu0 %v208
        %v321 = vpop.f32.mrb[0].mxu0
        %v322 = vadd.f32 %v243, %v321
        %v323 = vpop.f32.mrb[0].mxu0
        %324 = vmatprep.mubr.f32.mxu0 0.0
        %325 = vmatmul.mubr.f32.gmra.mrb[0].mxu0 %v209
        %v326 = vpop.f32.mrb[0].mxu0
        %v327 = vadd.f32 %v243, %v326
        %v328 = vpop.f32.mrb[0].mxu0
        %329 = vmatprep.mubr.f32.mxu0 0.0
        %330 = vmatmul.mubr.f32.gmra.mrb[0].mxu0 %v210
        %v331 = vpop.f32.mrb[0].mxu0
        %v332 = vadd.f32 %v243, %v331
        %v333 = vpop.f32.mrb[0].mxu0
        %334 = vmatprep.mubr.f32.mxu0 0.0
        %335 = vmatmul.mubr.f32.gmra.mrb[0].mxu0 %v211
        %v336 = vpop.f32.mrb[0].mxu0
        %v337 = vadd.f32 %v243, %v336
        %v338 = vpop.f32.mrb[0].mxu0
        %339 = vmatprep.mubr.f32.mxu0 0.0
        %340 = vmatmul.mubr.f32.gmra.mrb[0].mxu0 %v212
        %v341 = vpop.f32.mrb[0].mxu0
        %v342 = vadd.f32 %v243, %v341
        %v343 = vpop.f32.mrb[0].mxu0
        %344 = vmatprep.mubr.f32.mxu0 0.0
        %345 = vmatmul.mubr.f32.gmra.mrb[0].mxu0 %v213
        %v346 = vpop.f32.mrb[0].mxu0
        %v347 = vadd.f32 %v243, %v346
        %v348 = vpop.f32.mrb[0].mxu0
        %349 = vmatprep.mubr.f32.mxu0 0.0
        %350 = vmatmul.mubr.f32.gmra.mrb[0].mxu0 %v214
        %v351 = vpop.f32.mrb[0].mxu0
        %v352 = vadd.f32 %v243, %v351
        %v353 = vpop.f32.mrb[0].mxu0
        %354 = vmatprep.mubr.f32.mxu0 0.0
        %355 = vmatmul.mubr.f32.gmra.mrb[0].mxu0 %v215
        %v356 = vpop.f32.mrb[0].mxu0
        %v357 = vadd.f32 %v243, %v356
        %v358 = vpop.f32.mrb[0].mxu0
        %359 = vmatprep.mubr.f32.mxu0 0.0
        %360 = vmatmul.mubr.f32.gmra.mrb[0].mxu0 %v216
        %v361 = vpop.f32.mrb[0].mxu0
        %v362 = vadd.f32 %v243, %v361
        %v363 = vpop.f32.mrb[0].mxu0
        %364 = vmatprep.mubr.f32.mxu0 0.0
        %365 = vmatmul.mubr.f32.gmra.mrb[0].mxu0 %v217
        %v366 = vpop.f32.mrb[0].mxu0
        %v367 = vadd.f32 %v243, %v366
        %v368 = vpop.f32.mrb[0].mxu0
        %369 = vmatprep.mubr.f32.mxu0 0.0
        %370 = vmatmul.mubr.f32.gmra.mrb[0].mxu0 %v218
        %v371 = vpop.f32.mrb[0].mxu0
        %v372 = vadd.f32 %v243, %v371
        %v373 = vpop.f32.mrb[0].mxu0
        %374 = vmatprep.mubr.f32.mxu0 0.0
        %375 = vmatmul.mubr.f32.gmra.mrb[0].mxu0 %v219
        %v376 = vpop.f32.mrb[0].mxu0
        %v377 = vadd.f32 %v243, %v376
        %v378 = vpop.f32.mrb[0].mxu0
        %379 = vmatprep.mubr.f32.mxu0 0.0
        %380 = vmatmul.mubr.f32.gmra.mrb[0].mxu0 %v220
        %v381 = vpop.f32.mrb[0].mxu0
        %v382 = vadd.f32 %v243, %v381
        %v383 = vpop.f32.mrb[0].mxu0
        %384 = vmatprep.mubr.f32.mxu0 0.0
        %385 = vmatmul.mubr.f32.gmra.mrb[0].mxu0 %v221
        %v386 = vpop.f32.mrb[0].mxu0
        %v387 = vadd.f32 %v243, %v386
        %v388 = vpop.f32.mrb[0].mxu0
        %389 = vdwg.mxu0
        %390 = vst [vmem:[%s203] sm:$0xff] %v312
        %391 = vst [vmem:[%s203 + $0x8] sm:$0xff] %v317
        %392 = vst [vmem:[%s203 + $0x10] sm:$0xff] %v322
        %393 = vst [vmem:[%s203 + $0x18] sm:$0xff] %v327
        %394 = vst [vmem:[%s203 + $0x20] sm:$0xff] %v332
        %395 = vst [vmem:[%s203 + $0x28] sm:$0xff] %v337
        %396 = vst [vmem:[%s203 + $0x30] sm:$0xff] %v342
        %397 = vst [vmem:[%s203 + $0x38] sm:$0xff] %v347
        %398 = vst [vmem:[%s203 + $0x40] sm:$0xff] %v352
        %399 = vst [vmem:[%s203 + $0x48] sm:$0xff] %v357
        %400 = vst [vmem:[%s203 + $0x50] sm:$0xff] %v362
        %401 = vst [vmem:[%s203 + $0x58] sm:$0xff] %v367
        %402 = vst [vmem:[%s203 + $0x60] sm:$0xff] %v372
        %403 = vst [vmem:[%s203 + $0x68] sm:$0xff] %v377
        %404 = vst [vmem:[%s203 + $0x70] sm:$0xff] %v382
        %405 = vst [vmem:[%s203 + $0x78] sm:$0xff] %v387
        %s406 = sand.u32 %s97, 1
        %s407 = scalar_lea.sflag [#allocation4], %s406
        %s408 = sand.u32 %s97, 1
        %s409 = smul.addr %s408, 128
        %s410 = scalar_lea.vmem [#allocation7], %s409
        // Predicated region
        $region41: #{tpu_custom_call.1} parent=31 // pred_check
          %p411 = pneg %p107
        $region42: #{tpu_custom_call.1} parent=31 // pred_check_branch
          %413 = sbr.rel (%p411) target = $region44
        $region43: #{tpu_custom_call.1} parent=31 // pred_region
          %s414 = smul.u32 16, %s21
          %s416 = ssub.s32 2048, 2048
          %417 = vsyncadd %s407, %s416
          %s418 = smul.addr %s414, 128
          %s419 = scalar_lea.hbm %s3, %s418
          %s420 = sshll.u32 %s410, 4
          %s421 = int_to_ptr.vmem [resolvable:$true] %s420
          %426 = dma.vmem_to_hbm [thread:$0]  %s421, 2048, %s419, %s407, 128, 128, 8
        $region44: #{tpu_custom_call.1} parent=31 // pred_fallthru
          _
      $region32: #{tpu_custom_call.1} parent=5 // pred_fallthru
        _
      %p427 = scmp.le.s32.totalorder 2, %s16
      // Predicated region
      $region45: #{tpu_custom_call.1} parent=5 // pred_check
        %p428 = pneg %p427
      $region46: #{tpu_custom_call.1} parent=5 // pred_check_branch
        %430 = sbr.rel (%p428) target = $region48
      $region47: #{tpu_custom_call.1} parent=5 // pred_region
        %s431 = ssub.s32 %s16, 2
        // Predicated region
        $region49: #{tpu_custom_call.1} parent=47 // pred_check
          %p432 = pneg %p113
        $region50: #{tpu_custom_call.1} parent=47 // pred_check_branch
          %434 = sbr.rel (%p432) target = $region52
        $region51: #{tpu_custom_call.1} parent=47 // pred_region
          %s435 = sand.u32 %s98, 1
          %s436 = scalar_lea.sflag [#allocation4], %s435
          %s437 = sand.u32 %s98, 1
          %s438 = smul.addr %s437, 128
          %s439 = scalar_lea.vmem [#allocation7], %s438
          %440 = dma.done %s436, 2048
        $region52: #{tpu_custom_call.1} parent=47 // pred_fallthru
          _
      $region48: #{tpu_custom_call.1} parent=5 // pred_fallthru
        _
    $region6: #{tpu_custom_call.1} parent=1 // loop_footer
      %s20 = sadd.s32 1, %s16
    $region7: #{tpu_custom_call.1} parent=1 // loop_footer_branch
      %15 = sbr.rel target = $region3
    $region8: #{tpu_custom_call.1} parent=1 // loop_exit
      _
    %441 = vsyncpa [#allocation3], 1
    %s442 = scalar_lea.sflag [#allocation3], 1
    %443 = vsyncpa %s442, 1
    %444 = vsyncpa [#allocation6], 1
    %445 = vsyncpa [#allocation4], 1
    %s446 = scalar_lea.sflag [#allocation4], 1
    %447 = vsyncpa %s446, 1

</llo_original>
